<compile_context>
chip_gen: v5e
topology: v5e:2x2
jax: 0.10.0
libtpu: 0.0.40
codegen_flags: <defaults>
</compile_context>

<pallas_src>
import functools

import jax
import jax.numpy as jnp
from jax.experimental import pallas as pl
from jax.experimental.pallas import tpu as pltpu


def _layernorm_kernel(x_ref, w_ref, b_ref, o_ref, *, eps, num_channels):
    # x_ref / o_ref blocks: (tB, C, tT); w_ref / b_ref blocks: (1, C, 1).
    x = x_ref[...].astype(jnp.float32)

    inv_c = 1.0 / float(num_channels)
    mu = jnp.sum(x, axis=1, keepdims=True) * inv_c       # sublane reduce (XLU)
    res = x - mu
    sigma = jnp.sum(res * res, axis=1, keepdims=True) * inv_c
    inv = jax.lax.rsqrt(sigma + eps)                      # EUP slot — free here

    w = w_ref[...].astype(jnp.float32)
    b = b_ref[...].astype(jnp.float32)
    o_ref[...] = (res * inv * w + b).astype(o_ref.dtype)


def _vmem_limit_bytes():
    """Scoped-VMEM budget per chip: 64 MiB on 128-MiB-VMEM chips (v5e/v6e),
    32 MiB on v7x (64 MiB physical) or when the query is unavailable."""
    try:
        cap = int(pltpu.get_tpu_info().vmem_capacity_bytes)
        return min(cap // 2, 64 * 1024 * 1024)
    except Exception:
        return 32 * 1024 * 1024


def _choose_tiles(B, C, T, itemsize, vmem_limit_bytes):
    """Pick (tB, tT) so each grid step moves multi-MiB (ideally contiguous)
    in+out HBM traffic while the real VMEM footprint stays inside the budget.

    Per-block footprint model: 2x in + 2x out double buffers at the input
    dtype plus ~4 f32 temporaries of the block (x upcast, res, res*res, out).
    """
    budget = int(0.75 * vmem_limit_bytes)                 # headroom for Mosaic
    bytes_per_elem = 4 * itemsize + 4 * 4
    max_block_elems = max(1, budget // bytes_per_elem)

    if C * min(T, 128) > max_block_elems:
        # TODO(synk): add a C-tiled two-pass accumulator path (third grid axis
        # over C marked "arbitrary") for very large num_channels.
        raise NotImplementedError(
            "num_channels too large for single-block-per-(b,t) LayerNorm kernel")

    if C * T <= max_block_elems:
        # Full-T blocks: one fully contiguous HBM slab per block; fold batches
        # for small C. Take the smallest batch fold that reaches ~4 MiB input
        # blocks (don't oversize — keeps more tiles for the v7x 2-TC split).
        target_elems = (4 * 1024 * 1024) // itemsize
        fitting = [d for d in range(1, B + 1)
                   if B % d == 0 and d * C * T <= max_block_elems]
        reach = [d for d in fitting if d * C * T >= target_elems]
        tB = min(reach) if reach else max(fitting)
        # Keep >= 2 grid tiles for megacore when the array is big enough that
        # splitting it is worthwhile.
        if B // tB < 2 and B > 1 and B * C * T * itemsize > (4 << 20):
            smaller = [d for d in fitting if d < tB]
            if smaller:
                tB = max(smaller)
        return tB, T

    # T does not fit even with tB == 1: tile the lane axis in 128-multiples.
    fit_lanes = max_block_elems // C                       # >= 128 (checked above)
    cap_lanes = max(128, (8 * 1024 * 1024) // (C * itemsize))   # <= ~8 MiB blocks
    tT = (min(fit_lanes, cap_lanes) // 128) * 128
    tT = max(128, min(tT, T))
    if T % 128 == 0:
        # Prefer a tile that divides T exactly (no partial blocks).
        cand = tT
        while cand > 128 and T % cand != 0:
            cand -= 128
        if T % cand == 0:
            tT = cand
    return 1, tT


def layer_norm_bct(x, weight=None, bias=None, *, eps=1e-5, tile_b=None, tile_t=None):
    """LayerNorm over the channel dim for x of shape (B, C, T).

    weight, bias have shape (1, C, 1), matching the PyTorch module parameters.
    Passing None reproduces affine=False (identity scale / zero shift).
    """
    B, C, T = x.shape
    if weight is None:
        weight = jnp.ones((1, C, 1), dtype=x.dtype)
    if bias is None:
        bias = jnp.zeros((1, C, 1), dtype=x.dtype)
    assert weight.shape == (1, C, 1) and bias.shape == (1, C, 1)

    itemsize = jnp.dtype(x.dtype).itemsize
    vmem_limit = _vmem_limit_bytes()
    auto_tb, auto_tt = _choose_tiles(B, C, T, itemsize, vmem_limit)
    tB = auto_tb if tile_b is None else tile_b
    tT = auto_tt if tile_t is None else tile_t
    assert B % tB == 0, "tile_b must divide the batch dim"
    assert tT == T or tT % 128 == 0, "tile_t must be a 128-multiple or the full T"
    # NOTE: a partial last T block (T % tT != 0) reads padded lanes and writes
    # lane-masked. That is safe ONLY because the reduction is over C (axis 1):
    # every output lane depends solely on its own lane. Keep it that way.

    grid = (B // tB, pl.cdiv(T, tT))
    kernel = functools.partial(_layernorm_kernel, eps=eps, num_channels=C)

    # Advisory cost: memory-bound (read x + write out), tiny FLOP count.
    cost = pl.CostEstimate(
        flops=8 * B * C * T,
        transcendentals=B * T,
        bytes_accessed=2 * B * C * T * itemsize
        + 2 * C * jnp.dtype(weight.dtype).itemsize,
    )

    return pl.pallas_call(
        kernel,
        out_shape=jax.ShapeDtypeStruct((B, C, T), x.dtype),
        grid_spec=pltpu.PrefetchScalarGridSpec(
            num_scalar_prefetch=0,
            grid=grid,
            in_specs=[
                pl.BlockSpec((tB, C, tT), lambda b, t: (b, 0, t)),
                pl.BlockSpec((1, C, 1), lambda b, t: (0, 0, 0)),  # resident
                pl.BlockSpec((1, C, 1), lambda b, t: (0, 0, 0)),  # resident
            ],
            out_specs=pl.BlockSpec((tB, C, tT), lambda b, t: (b, 0, t)),
        ),
        compiler_params=pltpu.CompilerParams(
            # Both axes are independent -> shard tiles across v7x's 2 TCs.
            dimension_semantics=("parallel", "parallel"),
            vmem_limit_bytes=vmem_limit,
        ),
        cost_estimate=cost,
    )(x, weight, bias)


def _reference(x, weight, bias, eps):
    mu = jnp.mean(x, axis=1, keepdims=True)
    res = x - mu
    sigma = jnp.mean(res ** 2, axis=1, keepdims=True)
    return res / jnp.sqrt(sigma + eps) * weight + bias


if __name__ == "__main__":
    key = jax.random.PRNGKey(0)
    k1, k2 = jax.random.split(key)

    # Case 1: shapes implied by the module (B, C, T), auto tiling (full-T blocks).
    B, C, T = 2, 4, 16
    x = jax.random.normal(k1, (B, C, T), dtype=jnp.float32)
    weight = jnp.ones((1, C, 1), dtype=jnp.float32)
    bias = jnp.zeros((1, C, 1), dtype=jnp.float32)
    out = jax.block_until_ready(layer_norm_bct(x, weight, bias, eps=1e-5))
    ref = _reference(x, weight, bias, 1e-5)
    assert jnp.allclose(out, ref, atol=1e-5, rtol=1e-5), "case 1 mismatch"

    # Case 2: exercise the lane-tiled path, including a partial last T block.
    B2, C2, T2 = 2, 8, 200
    x2 = jax.random.normal(k2, (B2, C2, T2), dtype=jnp.float32)
    w2 = jax.random.normal(jax.random.PRNGKey(1), (1, C2, 1), dtype=jnp.float32)
    b2 = jax.random.normal(jax.random.PRNGKey(2), (1, C2, 1), dtype=jnp.float32)
    out2 = jax.block_until_ready(
        layer_norm_bct(x2, w2, b2, eps=1e-5, tile_b=1, tile_t=128))
    ref2 = _reference(x2, w2, b2, 1e-5)
    assert jnp.allclose(out2, ref2, atol=1e-5, rtol=1e-5), "case 2 mismatch"

    print("KERNEL_OK")
</pallas_src>

<mosaic_0001>
module attributes {stable_mosaic.version = 11 : i64} {
  func.func @_layernorm_kernel(%arg0: i32, %arg1: i32, %arg2: memref<2x4x16xf32, #tpu.memory_space<vmem>>, %arg3: memref<1x4x1xf32, #tpu.memory_space<vmem>>, %arg4: memref<1x4x1xf32, #tpu.memory_space<vmem>>, %arg5: memref<2x4x16xf32, #tpu.memory_space<vmem>>) attributes {dimension_semantics = [#tpu.dimension_semantics<parallel>, #tpu.dimension_semantics<parallel>], iteration_bounds = array<i64: 1, 1>, scalar_prefetch = 0 : i64, scratch_operands = 0 : i64, tpu.core_type = #tpu.core_type<tc>, window_params = [{transform_indices = @transform_0, window_bounds = array<i64: 2, 4, 16>}, {pipeline_mode = #tpu.pipeline_mode<synchronous>, transform_indices = @transform_1, window_bounds = array<i64: 1, 4, 1>}, {pipeline_mode = #tpu.pipeline_mode<synchronous>, transform_indices = @transform_2, window_bounds = array<i64: 1, 4, 1>}, {transform_indices = @transform_3, window_bounds = array<i64: 2, 4, 16>}]} {
    %c0 = arith.constant 0 : index
    %c0_0 = arith.constant 0 : index
    %c0_1 = arith.constant 0 : index
    %0 = vector.load %arg2[%c0, %c0_0, %c0_1] : memref<2x4x16xf32, #tpu.memory_space<vmem>>, vector<2x4x16xf32>
    %cst = arith.constant dense<0.000000e+00> : vector<2x16xf32>
    %1 = vector.multi_reduction <add>, %0, %cst [1] : vector<2x4x16xf32> to vector<2x16xf32>
    %2 = vector.shape_cast %1 : vector<2x16xf32> to vector<2x1x16xf32>
    %cst_2 = arith.constant 2.500000e-01 : f32
    %3 = vector.broadcast %cst_2 : f32 to vector<2x1x16xf32>
    %4 = arith.mulf %2, %3 : vector<2x1x16xf32>
    %5 = vector.broadcast %4 : vector<2x1x16xf32> to vector<2x4x16xf32>
    %6 = arith.subf %0, %5 : vector<2x4x16xf32>
    %7 = arith.mulf %6, %6 : vector<2x4x16xf32>
    %cst_3 = arith.constant dense<0.000000e+00> : vector<2x16xf32>
    %8 = vector.multi_reduction <add>, %7, %cst_3 [1] : vector<2x4x16xf32> to vector<2x16xf32>
    %9 = vector.shape_cast %8 : vector<2x16xf32> to vector<2x1x16xf32>
    %cst_4 = arith.constant 2.500000e-01 : f32
    %10 = vector.broadcast %cst_4 : f32 to vector<2x1x16xf32>
    %11 = arith.mulf %9, %10 : vector<2x1x16xf32>
    %cst_5 = arith.constant 9.99999974E-6 : f32
    %12 = vector.broadcast %cst_5 : f32 to vector<2x1x16xf32>
    %13 = arith.addf %11, %12 : vector<2x1x16xf32>
    %14 = math.rsqrt %13 : vector<2x1x16xf32>
    %c0_6 = arith.constant 0 : index
    %c0_7 = arith.constant 0 : index
    %c0_8 = arith.constant 0 : index
    %15 = vector.load %arg3[%c0_6, %c0_7, %c0_8] : memref<1x4x1xf32, #tpu.memory_space<vmem>>, vector<1x4x1xf32>
    %c0_9 = arith.constant 0 : index
    %c0_10 = arith.constant 0 : index
    %c0_11 = arith.constant 0 : index
    %16 = vector.load %arg4[%c0_9, %c0_10, %c0_11] : memref<1x4x1xf32, #tpu.memory_space<vmem>>, vector<1x4x1xf32>
    %17 = vector.broadcast %14 : vector<2x1x16xf32> to vector<2x4x16xf32>
    %18 = arith.mulf %6, %17 : vector<2x4x16xf32>
    %19 = vector.broadcast %15 : vector<1x4x1xf32> to vector<2x4x16xf32>
    %20 = arith.mulf %18, %19 : vector<2x4x16xf32>
    %21 = vector.broadcast %16 : vector<1x4x1xf32> to vector<2x4x16xf32>
    %22 = arith.addf %20, %21 : vector<2x4x16xf32>
    %c0_12 = arith.constant 0 : index
    %c0_13 = arith.constant 0 : index
    %c0_14 = arith.constant 0 : index
    %23 = vector.load %arg5[%c0_12, %c0_13, %c0_14] : memref<2x4x16xf32, #tpu.memory_space<vmem>>, vector<2x4x16xf32>
    tpu.vector_store %arg5[%c0_12, %c0_13, %c0_14], %22 {strides = array<i32>} : memref<2x4x16xf32, #tpu.memory_space<vmem>>, vector<2x4x16xf32>,
    return
  }
  func.func @transform_0(%arg0: i32, %arg1: i32) -> (i32, i32, i32) {
    %c0_i32 = arith.constant 0 : i32
    %c0_i32_0 = arith.constant 0 : i32
    return %arg0, %c0_i32, %arg1 : i32, i32, i32
  }
  func.func @transform_1(%arg0: i32, %arg1: i32) -> (i32, i32, i32) {
    %c0_i32 = arith.constant 0 : i32
    %c0_i32_0 = arith.constant 0 : i32
    %c0_i32_1 = arith.constant 0 : i32
    %c0_i32_2 = arith.constant 0 : i32
    return %c0_i32, %c0_i32_0, %c0_i32_1 : i32, i32, i32
  }
  func.func @transform_2(%arg0: i32, %arg1: i32) -> (i32, i32, i32) {
    %c0_i32 = arith.constant 0 : i32
    %c0_i32_0 = arith.constant 0 : i32
    %c0_i32_1 = arith.constant 0 : i32
    %c0_i32_2 = arith.constant 0 : i32
    return %c0_i32, %c0_i32_0, %c0_i32_1 : i32, i32, i32
  }
  func.func @transform_3(%arg0: i32, %arg1: i32) -> (i32, i32, i32) {
    %c0_i32 = arith.constant 0 : i32
    %c0_i32_0 = arith.constant 0 : i32
    return %arg0, %c0_i32, %arg1 : i32, i32, i32
  }
}

</mosaic_0001>

<llo_original>
// kernel: tpu_custom_call.1
$region0: #{tpu_custom_call.1}
  #allocation0 [shape = 'u32[]', space=smem, size = 0x4, offset = 0x4, fixed_abs, tag = 'smem constant byte address 0x4 - core index']
  #allocation1 [shape = 'u32[72,128]{1,0:T(1,128)}', space=vmem, size = 0x9000, scoped, tag = 'internal scratch']
  %s0 = inlined_call_operand.vmem [shape: f32[2,4,16], index: 0, kind: input, shape index: {}]
  %s1 = inlined_call_operand.vmem [shape: f32[1,4,1], index: 1, kind: input, shape index: {}]
  %s2 = inlined_call_operand.vmem [shape: f32[1,4,1], index: 2, kind: input, shape index: {}]
  %s3 = inlined_call_operand.hbm [shape: f32[2,4,16], index: 3, kind: output, shape index: {}]
  %s4 = sld [smem:[#allocation0]]
  $region22: #{tpu_custom_call.1} parent=0
    _
  %s6 = ssub.s32 1, %s4
  %s7 = scalar_select 0, %s6, %s4
  $region1: #{tpu_custom_call.1} parent=0
    #allocation2 [shape = 'u8[4096]{0}', space=vmem, size = 0x1000, scoped, tag = 'output window, operand 0, single buffered']
    #allocation3 [shape = 's32[1]{0}', space=sflag, size = 0x4, scoped, tag = 'scoped memory for tpu_custom_call.1']
    %8 = vsyncpa [#allocation3], 0
    // Predicated region
    $region2: #{tpu_custom_call.1} parent=1 // pred_check
      _
    $region3: #{tpu_custom_call.1} parent=1 // pred_check_branch
      %10 = sbr.rel (0) target = $region5
    $region4: #{tpu_custom_call.1} parent=1 // pred_region
      _
    $region5: #{tpu_custom_call.1} parent=1 // pred_fallthru
      _
    // Predicated region
    $region6: #{tpu_custom_call.1} parent=1 // pred_check
      _
    $region7: #{tpu_custom_call.1} parent=1 // pred_check_branch
      %12 = sbr.rel (0) target = $region9
    $region8: #{tpu_custom_call.1} parent=1 // pred_region
      _
    $region9: #{tpu_custom_call.1} parent=1 // pred_fallthru
      _
    // Predicated region
    $region10: #{tpu_custom_call.1} parent=1 // pred_check
      _
    $region11: #{tpu_custom_call.1} parent=1 // pred_check_branch
      %14 = sbr.rel (0) target = $region13
    $region12: #{tpu_custom_call.1} parent=1 // pred_region
      _
    $region13: #{tpu_custom_call.1} parent=1 // pred_fallthru
      _
    %v15 = vld [vmem:[%s0] sm:$0xf]
    %v16 = vld [vmem:[%s0 + $0x4] sm:$0xf]
    %vm17 = vcmask 125952
    %v18 = vsel %vm17, %v15, 0.0
    %v19 = vrot.slane %v18, 4
    %v20 = vadd.f32 %v18, %v19
    %v21 = vrot.slane %v20, 2
    %v22 = vadd.f32 %v20, %v21
    %v23 = vrot.slane %v22, 1
    %v24 = vadd.f32 %v22, %v23
    %v25 = vsel %vm17, %v16, 0.0
    %v26 = vrot.slane %v25, 4
    %v27 = vadd.f32 %v25, %v26
    %v28 = vrot.slane %v27, 2
    %v29 = vadd.f32 %v27, %v28
    %v30 = vrot.slane %v29, 1
    %v31 = vadd.f32 %v29, %v30
    %v32 = vmul.f32 %v24, 0.25
    %v33 = vmul.f32 %v31, 0.25
    %v34 = vsub.f32 %v15, %v32
    %v35 = vsub.f32 %v16, %v33
    %v36 = vmul.f32 %v34, %v34
    %v37 = vmul.f32 %v35, %v35
    %v38 = vsel %vm17, %v36, 0.0
    %v39 = vrot.slane %v38, 4
    %v40 = vadd.f32 %v38, %v39
    %v41 = vrot.slane %v40, 2
    %v42 = vadd.f32 %v40, %v41
    %v43 = vrot.slane %v42, 1
    %v44 = vadd.f32 %v42, %v43
    %v45 = vsel %vm17, %v37, 0.0
    %v46 = vrot.slane %v45, 4
    %v47 = vadd.f32 %v45, %v46
    %v48 = vrot.slane %v47, 2
    %v49 = vadd.f32 %v47, %v48
    %v50 = vrot.slane %v49, 1
    %v51 = vadd.f32 %v49, %v50
    %v52 = vmul.f32 %v44, 0.25
    %v53 = vmul.f32 %v51, 0.25
    %v54 = vadd.f32 %v52, 1e-05
    %v55 = vadd.f32 %v53, 1e-05
    %v56 = vrsqrt.pop %v54
    %v57 = vmul.f32 %v56, %v54
    %v58 = vmul.f32 %v57, %v56
    %v59 = vmul.f32 0.5, %v58
    %v60 = vsub.f32 1.5, %v59
    %v61 = vmul.f32 %v56, %v60
    %vm62 = vweird.f32 %v54
    %vm63 = vweird.f32 %v56
    %vm64 = vmor %vm62, %vm63
    %v65 = vsel %vm64, %v56, %v61
    %v66 = vrsqrt.pop %v55
    %v67 = vmul.f32 %v66, %v55
    %v68 = vmul.f32 %v67, %v66
    %v69 = vmul.f32 0.5, %v68
    %v70 = vsub.f32 1.5, %v69
    %v71 = vmul.f32 %v66, %v70
    %vm72 = vweird.f32 %v55
    %vm73 = vweird.f32 %v66
    %vm74 = vmor %vm72, %vm73
    %v75 = vsel %vm74, %v66, %v71
    %v76 = vld [vmem:[%s1] sm:$0xf]
    %v77 = vld [vmem:[%s2] sm:$0xf]
    %v78 = vmul.f32 %v34, %v65
    %v79 = vmul.f32 %v35, %v75
    %81 = vset.pattern.permute.xlu0 0
    %82 = vperm.xlu0 %81, %v76
    %v83 = vpop.permute.xlu0 %82
    %v85 = vmul.f32 %v78, %v83
    %v86 = vmul.f32 %v79, %v83
    %88 = vset.pattern.permute.xlu0 0
    %89 = vperm.xlu0 %88, %v77
    %v90 = vpop.permute.xlu0 %89
    %v92 = vadd.f32 %v85, %v90
    %v93 = vadd.f32 %v86, %v90
    %94 = vst.msk [vmem:[#allocation2] sm:$0xf] %vm17, %v92
    %95 = vst.msk [vmem:[#allocation2 + $0x4] sm:$0xf] %vm17, %v93
    // Predicated region
    $region14: #{tpu_custom_call.1} parent=1 // pred_check
      _
    $region15: #{tpu_custom_call.1} parent=1 // pred_check_branch
      %97 = sbr.rel (0) target = $region17
    $region16: #{tpu_custom_call.1} parent=1 // pred_region
      %99 = vsyncadd [#allocation3], 0
      %s100 = sshll.u32 [#allocation2], 4
      %s101 = int_to_ptr.vmem [resolvable:$true] %s100
      %s102 = sshll.u32 %s3, 4
      %s103 = int_to_ptr.hbm [resolvable:$true] %s102
      %108 = dma.vmem_to_hbm [thread:$0]  %s101, 128, %s103, [#allocation3], 64, 64, 4
    $region17: #{tpu_custom_call.1} parent=1 // pred_fallthru
      _
    // Predicated region
    $region18: #{tpu_custom_call.1} parent=1 // pred_check
      _
    $region19: #{tpu_custom_call.1} parent=1 // pred_check_branch
      %110 = sbr.rel (0) target = $region21
    $region20: #{tpu_custom_call.1} parent=1 // pred_region
      %112 = dma.done [#allocation3], 128
    $region21: #{tpu_custom_call.1} parent=1 // pred_fallthru
      _
    %113 = vsyncpa [#allocation3], 1

</llo_original>
